<compile_context>
chip_gen: v6e
topology: v6e:2x2x1
jax: 0.10.0
libtpu: 0.0.40
codegen_flags: <defaults>
</compile_context>

<pallas_src>
import functools

import jax
import jax.numpy as jnp
from jax.experimental import pallas as pl
from jax.experimental.pallas import tpu as pltpu


def _flash_attend_kernel(q_ref, k_ref, v_ref, o_ref,
                         qs_sc, m_sc, l_sc, acc_sc, *, scale):
    # q_ref: (hb, tq, D)   k_ref/v_ref: (hb, tk, D)   o_ref: (hb, tq, D)
    # qs_sc: (hb, tq, D) in compute dtype (scaled Q, filled once per q tile)
    # m_sc/l_sc: (hb, tq, 1) f32   acc_sc: (hb, tq, D) f32
    kv = pl.program_id(2)
    last_kv = pl.num_programs(2) - 1

    @pl.when(kv == 0)
    def _():
        # Fold the softmax scale into Q once per q tile: hb*tq*D multiplies
        # instead of hb*tq*tk every kv step.
        qs_sc[...] = (q_ref[...] * scale).astype(qs_sc.dtype)

    # sim = (q*scale) @ k^T over dim_head, batched over the head block.
    # Native-dtype inputs, f32 MXU accumulation, trailing-dim contraction
    # (no XLU transpose of the K tile).
    s = jnp.einsum(
        "bqd,bkd->bqk", qs_sc[...], k_ref[...],
        preferred_element_type=jnp.float32,
    )
    m_cur = jnp.max(s, axis=-1, keepdims=True)

    @pl.when(kv == 0)
    def _():
        # First kv step: write stats directly (no zero-init store, no
        # exp(-inf) path, no read-modify-write of the accumulator).
        p = jnp.exp(s - m_cur)
        m_sc[...] = m_cur
        l_sc[...] = jnp.sum(p, axis=-1, keepdims=True)
        acc_sc[...] = jnp.einsum(
            "bqk,bkd->bqd", p.astype(v_ref.dtype), v_ref[...],
            preferred_element_type=jnp.float32,
        )

    @pl.when(kv > 0)
    def _():
        m_prev = m_sc[...]
        m_new = jnp.maximum(m_prev, m_cur)
        alpha = jnp.exp(m_prev - m_new)          # rescale factor for old stats
        p = jnp.exp(s - m_new)                   # (hb, tq, tk) f32
        l_sc[...] = alpha * l_sc[...] + jnp.sum(p, axis=-1, keepdims=True)
        acc_sc[...] = alpha * acc_sc[...] + jnp.einsum(
            "bqk,bkd->bqd", p.astype(v_ref.dtype), v_ref[...],
            preferred_element_type=jnp.float32,
        )
        m_sc[...] = m_new

    @pl.when(kv == last_kv)
    def _():
        # Runs once per q tile on (hb, tq, 1); exact reciprocal is free here.
        inv_l = pl.reciprocal(l_sc[...], approx=False)
        o_ref[...] = (acc_sc[...] * inv_l).astype(o_ref.dtype)


def _pick_q_tile(n):
    # Big q tiles: every q tile forces a full HBM pass over K and V, so bigger
    # tq directly cuts K/V streaming traffic and amortizes per-step overhead.
    for t in (1024, 512, 256, 128, 64, 32, 16, 8):
        if n % t == 0:
            return t
    return n


def _pick_kv_tile(n):
    # kv tiles stay moderate (~256): they are re-streamed per q tile and also
    # set the width of the f32 s/p temporaries.
    for t in (256, 512, 128, 64, 32, 16, 8):
        if n % t == 0:
            return t
    return n


def _pick_head_block(bh, d, n_q_tiles):
    # Batch a few heads per grid step when dim_head is small (amortizes
    # per-step overhead); keep it modest (hb*D <= 128) since head batching
    # does not improve MXU fill (QK^T contracts over D).
    hb = 1
    for cand in (2, 4, 8):
        if bh % cand == 0 and cand * d <= 128:
            hb = cand
    # Don't collapse the parallel grid below 2 (v7x has 2 TensorCores).
    while hb > 1 and (bh // hb) * n_q_tiles < 2:
        hb //= 2
    return max(hb, 1)


def _vmem_bytes(hb, tq, tk, d, in_bytes, out_bytes):
    q_io = 2 * hb * tq * d * in_bytes          # double-buffered Q tile
    k_io = 2 * hb * tk * d * in_bytes          # double-buffered K tile
    v_io = 2 * hb * tk * d * in_bytes          # double-buffered V tile
    o_io = 2 * hb * tq * d * out_bytes         # double-buffered O tile
    acc = hb * tq * d * 4                      # f32 accumulator
    qs = hb * tq * d * in_bytes                # scaled-Q scratch
    ml = 2 * hb * tq * 128 * 4                 # m/l: (hb,tq,1) pads lanes->128
    sp = 3 * hb * tq * tk * 4                  # s/p f32 temporaries + headroom
    return q_io + k_io + v_io + o_io + acc + qs + ml + sp


_VMEM_LIMIT = 32 * 1024 * 1024   # raise v5e's 16 MiB scoped default; <= v7x physical
_VMEM_BUDGET = 24 * 1024 * 1024  # leave headroom under the limit


def attend(q, k, v, scale=None, dropout=0.0, cast_to_bf16=True):
    """Pallas flash-attention implementation of Attend.forward (einsum path, eval).

    q, k, v: (B, H, N, D) arrays. Returns (B, H, N, D). Non-causal, no mask.
    """
    # TODO(synk): attn_dropout (training-mode dropout on the attention matrix)
    # is not implemented; this kernel covers the eval forward path only.
    assert dropout == 0.0, "training-mode attention dropout not supported"
    assert q.shape == k.shape == v.shape, "q, k, v must share shape (B,H,N,D)"
    B, H, N, D = q.shape
    if scale is None:
        scale = float(D) ** -0.5

    out_dtype = q.dtype
    compute_dtype = q.dtype
    if cast_to_bf16 and q.dtype == jnp.float32:
        # bf16 inputs + f32 MXU accumulation: ~2x matmul rate, half the K/V
        # streaming bytes on every TPU generation.
        compute_dtype = jnp.bfloat16

    BH = B * H
    qf = q.reshape(BH, N, D).astype(compute_dtype)
    kf = k.reshape(BH, N, D).astype(compute_dtype)
    vf = v.reshape(BH, N, D).astype(compute_dtype)

    tq = _pick_q_tile(N)
    tk = _pick_kv_tile(N)
    hb = _pick_head_block(BH, D, N // tq)

    in_bytes = jnp.dtype(compute_dtype).itemsize
    out_bytes = jnp.dtype(out_dtype).itemsize
    # Shrink hb, then tq, if the bigger tiles would overrun the VMEM budget
    # (binding on v5e scoped default / v7x 64 MiB physical).
    while hb > 1 and _vmem_bytes(hb, tq, tk, D, in_bytes, out_bytes) > _VMEM_BUDGET:
        hb //= 2
    while (tq > 128 and N % (tq // 2) == 0
           and _vmem_bytes(hb, tq, tk, D, in_bytes, out_bytes) > _VMEM_BUDGET):
        tq //= 2

    kernel = functools.partial(_flash_attend_kernel, scale=scale)

    # Q / O tiles stay resident across the kv axis (index_map ignores j).
    q_spec = pl.BlockSpec((hb, tq, D), lambda b, i, j: (b, i, 0))
    k_spec = pl.BlockSpec((hb, tk, D), lambda b, i, j: (b, j, 0))
    v_spec = pl.BlockSpec((hb, tk, D), lambda b, i, j: (b, j, 0))
    o_spec = pl.BlockSpec((hb, tq, D), lambda b, i, j: (b, i, 0))

    out = pl.pallas_call(
        kernel,
        out_shape=jax.ShapeDtypeStruct((BH, N, D), out_dtype),
        grid_spec=pltpu.PrefetchScalarGridSpec(
            num_scalar_prefetch=0,
            grid=(BH // hb, N // tq, N // tk),
            in_specs=[q_spec, k_spec, v_spec],
            out_specs=o_spec,
            scratch_shapes=[
                pltpu.VMEM((hb, tq, D), compute_dtype),  # scaled Q (per q tile)
                pltpu.VMEM((hb, tq, 1), jnp.float32),    # running max
                pltpu.VMEM((hb, tq, 1), jnp.float32),    # running denominator
                pltpu.VMEM((hb, tq, D), jnp.float32),    # f32 output accumulator
            ],
        ),
        compiler_params=pltpu.CompilerParams(
            dimension_semantics=("parallel", "parallel", "arbitrary"),
            vmem_limit_bytes=_VMEM_LIMIT,
        ),
    )(qf, kf, vf)

    return out.reshape(B, H, N, D)


def _attend_reference(q, k, v, scale=None):
    B, H, N, D = q.shape
    if scale is None:
        scale = float(D) ** -0.5
    sim = jnp.einsum("bhid,bhjd->bhij", q.astype(jnp.float32),
                     k.astype(jnp.float32)) * scale
    attn = jax.nn.softmax(sim, axis=-1)
    out = jnp.einsum("bhij,bhjd->bhid", attn, v.astype(jnp.float32))
    return out.astype(q.dtype)


def _check(B, H, N, D, key, cast_to_bf16=True, atol=2.5e-2, rtol=2.5e-2):
    kq, kk, kv = jax.random.split(key, 3)
    q = jax.random.normal(kq, (B, H, N, D), dtype=jnp.float32)
    k = jax.random.normal(kk, (B, H, N, D), dtype=jnp.float32)
    v = jax.random.normal(kv, (B, H, N, D), dtype=jnp.float32)

    out = jax.block_until_ready(attend(q, k, v, cast_to_bf16=cast_to_bf16))
    ref = _attend_reference(q, k, v)

    assert out.shape == (B, H, N, D)
    assert out.dtype == q.dtype
    assert jnp.allclose(out, ref, atol=atol, rtol=rtol), "mismatch vs reference"


if __name__ == "__main__":
    key = jax.random.PRNGKey(0)
    k1, k2, k3 = jax.random.split(key, 3)

    # Small shape matching the module's expected (B, H, N, D) layout.
    _check(B=2, H=4, N=8, D=32, key=k1)
    # Larger sequence exercising the multi-tile online-softmax path
    # (N=512 -> tq=512, tk=256, 2 kv steps per q tile).
    _check(B=1, H=2, N=512, D=64, key=k2)
    # Full-f32 path (no bf16 cast) validates the kernel math more tightly.
    _check(B=1, H=2, N=256, D=64, key=k3, cast_to_bf16=False,
           atol=2e-3, rtol=2e-3)

    print("KERNEL_OK")
</pallas_src>

<mosaic_0001>
module attributes {stable_mosaic.version = 11 : i64} {
  func.func @_flash_attend_kernel(%arg0: i32, %arg1: i32, %arg2: i32, %arg3: memref<4x8x32xbf16, #tpu.memory_space<vmem>>, %arg4: memref<4x8x32xbf16, #tpu.memory_space<vmem>>, %arg5: memref<4x8x32xbf16, #tpu.memory_space<vmem>>, %arg6: memref<4x8x32xf32, #tpu.memory_space<vmem>>, %arg7: memref<4x8x32xbf16, #tpu.memory_space<vmem>>, %arg8: memref<4x8x1xf32, #tpu.memory_space<vmem>>, %arg9: memref<4x8x1xf32, #tpu.memory_space<vmem>>, %arg10: memref<4x8x32xf32, #tpu.memory_space<vmem>>) attributes {dimension_semantics = [#tpu.dimension_semantics<parallel>, #tpu.dimension_semantics<parallel>, #tpu.dimension_semantics<arbitrary>], iteration_bounds = array<i64: 2, 1, 1>, scalar_prefetch = 0 : i64, scratch_operands = 4 : i64, tpu.core_type = #tpu.core_type<tc>, window_params = [{transform_indices = @transform_0, window_bounds = array<i64: 4, 8, 32>}, {transform_indices = @transform_1, window_bounds = array<i64: 4, 8, 32>}, {transform_indices = @transform_2, window_bounds = array<i64: 4, 8, 32>}, {transform_indices = @transform_3, window_bounds = array<i64: 4, 8, 32>}]} {
    %c0_i32 = arith.constant 0 : i32
    %0 = arith.cmpi eq, %arg2, %c0_i32 : i32
    %1 = arith.extui %0 : i1 to i32
    %c0_i32_0 = arith.constant 0 : i32
    %2 = arith.cmpi ne, %1, %c0_i32_0 : i32
    scf.if %2 {
      %c0_13 = arith.constant 0 : index
      %c0_14 = arith.constant 0 : index
      %c0_15 = arith.constant 0 : index
      %17 = vector.load %arg3[%c0_13, %c0_14, %c0_15] : memref<4x8x32xbf16, #tpu.memory_space<vmem>>, vector<4x8x32xbf16>
      %cst_16 = arith.constant 1.767580e-01 : bf16
      %18 = vector.broadcast %cst_16 : bf16 to vector<4x8x32xbf16>
      %19 = arith.mulf %17, %18 : vector<4x8x32xbf16>
      %c0_17 = arith.constant 0 : index
      %c0_18 = arith.constant 0 : index
      %c0_19 = arith.constant 0 : index
      %20 = vector.load %arg7[%c0_17, %c0_18, %c0_19] : memref<4x8x32xbf16, #tpu.memory_space<vmem>>, vector<4x8x32xbf16>
      tpu.vector_store %arg7[%c0_17, %c0_18, %c0_19], %19 {strides = array<i32>} : memref<4x8x32xbf16, #tpu.memory_space<vmem>>, vector<4x8x32xbf16>,
    } else {
    }
    %c0 = arith.constant 0 : index
    %c0_1 = arith.constant 0 : index
    %c0_2 = arith.constant 0 : index
    %3 = vector.load %arg7[%c0, %c0_1, %c0_2] : memref<4x8x32xbf16, #tpu.memory_space<vmem>>, vector<4x8x32xbf16>
    %c0_3 = arith.constant 0 : index
    %c0_4 = arith.constant 0 : index
    %c0_5 = arith.constant 0 : index
    %4 = vector.load %arg4[%c0_3, %c0_4, %c0_5] : memref<4x8x32xbf16, #tpu.memory_space<vmem>>, vector<4x8x32xbf16>
    "tpu.trace_start"() <{level = 10 : i32, message = "bqd,bkd->bqk"}> : () -> ()
    %cst = arith.constant dense<0.000000e+00> : vector<4x8x8xf32>
    %5 = tpu.matmul %3, %4, %cst {dimension_numbers = #tpu.dot_dimension_numbers<[2], [2], [1], [1], [0, 0, 0, 1, 1, 1], [0], [0]>} : vector<4x8x32xbf16>, vector<4x8x32xbf16>, vector<4x8x8xf32> -> vector<4x8x8xf32>
    "tpu.trace_stop"() : () -> ()
    %cst_6 = arith.constant dense<0xFF800000> : vector<4x8xf32>
    %6 = vector.multi_reduction <maximumf>, %5, %cst_6 [2] : vector<4x8x8xf32> to vector<4x8xf32>
    %7 = vector.shape_cast %6 : vector<4x8xf32> to vector<4x8x1xf32>
    %c0_i32_7 = arith.constant 0 : i32
    %8 = arith.cmpi eq, %arg2, %c0_i32_7 : i32
    %9 = arith.extui %8 : i1 to i32
    %c0_i32_8 = arith.constant 0 : i32
    %10 = arith.cmpi ne, %9, %c0_i32_8 : i32
    scf.if %10 {
      %17 = vector.broadcast %7 : vector<4x8x1xf32> to vector<4x8x8xf32>
      %18 = arith.subf %5, %17 : vector<4x8x8xf32>
      %19 = math.exp %18 : vector<4x8x8xf32>
      %c0_13 = arith.constant 0 : index
      %c0_14 = arith.constant 0 : index
      %c0_15 = arith.constant 0 : index
      %20 = vector.load %arg8[%c0_13, %c0_14, %c0_15] : memref<4x8x1xf32, #tpu.memory_space<vmem>>, vector<4x8x1xf32>
      tpu.vector_store %arg8[%c0_13, %c0_14, %c0_15], %7 {strides = array<i32>} : memref<4x8x1xf32, #tpu.memory_space<vmem>>, vector<4x8x1xf32>,
      %cst_16 = arith.constant dense<0.000000e+00> : vector<4x8xf32>
      %21 = vector.multi_reduction <add>, %19, %cst_16 [2] : vector<4x8x8xf32> to vector<4x8xf32>
      %22 = vector.shape_cast %21 : vector<4x8xf32> to vector<4x8x1xf32>
      %c0_17 = arith.constant 0 : index
      %c0_18 = arith.constant 0 : index
      %c0_19 = arith.constant 0 : index
      %23 = vector.load %arg9[%c0_17, %c0_18, %c0_19] : memref<4x8x1xf32, #tpu.memory_space<vmem>>, vector<4x8x1xf32>
      tpu.vector_store %arg9[%c0_17, %c0_18, %c0_19], %22 {strides = array<i32>} : memref<4x8x1xf32, #tpu.memory_space<vmem>>, vector<4x8x1xf32>,
      %24 = arith.truncf %19 : vector<4x8x8xf32> to vector<4x8x8xbf16>
      %c0_20 = arith.constant 0 : index
      %c0_21 = arith.constant 0 : index
      %c0_22 = arith.constant 0 : index
      %25 = vector.load %arg5[%c0_20, %c0_21, %c0_22] : memref<4x8x32xbf16, #tpu.memory_space<vmem>>, vector<4x8x32xbf16>
      "tpu.trace_start"() <{level = 10 : i32, message = "bqk,bkd->bqd"}> : () -> ()
      %cst_23 = arith.constant dense<0.000000e+00> : vector<4x8x32xf32>
      %26 = tpu.matmul %24, %25, %cst_23 {dimension_numbers = #tpu.dot_dimension_numbers<[2], [1], [1], [2], [0, 0, 0, 1, 1, 2], [0], [0]>} : vector<4x8x8xbf16>, vector<4x8x32xbf16>, vector<4x8x32xf32> -> vector<4x8x32xf32>
      "tpu.trace_stop"() : () -> ()
      %c0_24 = arith.constant 0 : index
      %c0_25 = arith.constant 0 : index
      %c0_26 = arith.constant 0 : index
      %27 = vector.load %arg10[%c0_24, %c0_25, %c0_26] : memref<4x8x32xf32, #tpu.memory_space<vmem>>, vector<4x8x32xf32>
      tpu.vector_store %arg10[%c0_24, %c0_25, %c0_26], %26 {strides = array<i32>} : memref<4x8x32xf32, #tpu.memory_space<vmem>>, vector<4x8x32xf32>,
    } else {
    }
    %c0_i32_9 = arith.constant 0 : i32
    %11 = arith.cmpi sgt, %arg2, %c0_i32_9 : i32
    %12 = arith.extui %11 : i1 to i32
    %c0_i32_10 = arith.constant 0 : i32
    %13 = arith.cmpi ne, %12, %c0_i32_10 : i32
    scf.if %13 {
      %c0_13 = arith.constant 0 : index
      %c0_14 = arith.constant 0 : index
      %c0_15 = arith.constant 0 : index
      %17 = vector.load %arg8[%c0_13, %c0_14, %c0_15] : memref<4x8x1xf32, #tpu.memory_space<vmem>>, vector<4x8x1xf32>
      %18 = arith.maximumf %17, %7 : vector<4x8x1xf32>
      %19 = arith.subf %17, %18 : vector<4x8x1xf32>
      %20 = math.exp %19 : vector<4x8x1xf32>
      %21 = vector.broadcast %18 : vector<4x8x1xf32> to vector<4x8x8xf32>
      %22 = arith.subf %5, %21 : vector<4x8x8xf32>
      %23 = math.exp %22 : vector<4x8x8xf32>
      %c0_16 = arith.constant 0 : index
      %c0_17 = arith.constant 0 : index
      %c0_18 = arith.constant 0 : index
      %24 = vector.load %arg9[%c0_16, %c0_17, %c0_18] : memref<4x8x1xf32, #tpu.memory_space<vmem>>, vector<4x8x1xf32>
      %25 = arith.mulf %20, %24 : vector<4x8x1xf32>
      %cst_19 = arith.constant dense<0.000000e+00> : vector<4x8xf32>
      %26 = vector.multi_reduction <add>, %23, %cst_19 [2] : vector<4x8x8xf32> to vector<4x8xf32>
      %27 = vector.shape_cast %26 : vector<4x8xf32> to vector<4x8x1xf32>
      %28 = arith.addf %25, %27 : vector<4x8x1xf32>
      %c0_20 = arith.constant 0 : index
      %c0_21 = arith.constant 0 : index
      %c0_22 = arith.constant 0 : index
      %29 = vector.load %arg9[%c0_20, %c0_21, %c0_22] : memref<4x8x1xf32, #tpu.memory_space<vmem>>, vector<4x8x1xf32>
      tpu.vector_store %arg9[%c0_20, %c0_21, %c0_22], %28 {strides = array<i32>} : memref<4x8x1xf32, #tpu.memory_space<vmem>>, vector<4x8x1xf32>,
      %c0_23 = arith.constant 0 : index
      %c0_24 = arith.constant 0 : index
      %c0_25 = arith.constant 0 : index
      %30 = vector.load %arg10[%c0_23, %c0_24, %c0_25] : memref<4x8x32xf32, #tpu.memory_space<vmem>>, vector<4x8x32xf32>
      %31 = vector.broadcast %20 : vector<4x8x1xf32> to vector<4x8x32xf32>
      %32 = arith.mulf %31, %30 : vector<4x8x32xf32>
      %33 = arith.truncf %23 : vector<4x8x8xf32> to vector<4x8x8xbf16>
      %c0_26 = arith.constant 0 : index
      %c0_27 = arith.constant 0 : index
      %c0_28 = arith.constant 0 : index
      %34 = vector.load %arg5[%c0_26, %c0_27, %c0_28] : memref<4x8x32xbf16, #tpu.memory_space<vmem>>, vector<4x8x32xbf16>
      "tpu.trace_start"() <{level = 10 : i32, message = "bqk,bkd->bqd"}> : () -> ()
      %cst_29 = arith.constant dense<0.000000e+00> : vector<4x8x32xf32>
      %35 = tpu.matmul %33, %34, %cst_29 {dimension_numbers = #tpu.dot_dimension_numbers<[2], [1], [1], [2], [0, 0, 0, 1, 1, 2], [0], [0]>} : vector<4x8x8xbf16>, vector<4x8x32xbf16>, vector<4x8x32xf32> -> vector<4x8x32xf32>
      "tpu.trace_stop"() : () -> ()
      %36 = arith.addf %32, %35 : vector<4x8x32xf32>
      %c0_30 = arith.constant 0 : index
      %c0_31 = arith.constant 0 : index
      %c0_32 = arith.constant 0 : index
      %37 = vector.load %arg10[%c0_30, %c0_31, %c0_32] : memref<4x8x32xf32, #tpu.memory_space<vmem>>, vector<4x8x32xf32>
      tpu.vector_store %arg10[%c0_30, %c0_31, %c0_32], %36 {strides = array<i32>} : memref<4x8x32xf32, #tpu.memory_space<vmem>>, vector<4x8x32xf32>,
      %c0_33 = arith.constant 0 : index
      %c0_34 = arith.constant 0 : index
      %c0_35 = arith.constant 0 : index
      %38 = vector.load %arg8[%c0_33, %c0_34, %c0_35] : memref<4x8x1xf32, #tpu.memory_space<vmem>>, vector<4x8x1xf32>
      tpu.vector_store %arg8[%c0_33, %c0_34, %c0_35], %18 {strides = array<i32>} : memref<4x8x1xf32, #tpu.memory_space<vmem>>, vector<4x8x1xf32>,
    } else {
    }
    %c0_i32_11 = arith.constant 0 : i32
    %14 = arith.cmpi eq, %arg2, %c0_i32_11 : i32
    %15 = arith.extui %14 : i1 to i32
    %c0_i32_12 = arith.constant 0 : i32
    %16 = arith.cmpi ne, %15, %c0_i32_12 : i32
    scf.if %16 {
      %c0_13 = arith.constant 0 : index
      %c0_14 = arith.constant 0 : index
      %c0_15 = arith.constant 0 : index
      %17 = vector.load %arg9[%c0_13, %c0_14, %c0_15] : memref<4x8x1xf32, #tpu.memory_space<vmem>>, vector<4x8x1xf32>
      %18 = tpu.reciprocal %17 : vector<4x8x1xf32> -> vector<4x8x1xf32>
      %c0_16 = arith.constant 0 : index
      %c0_17 = arith.constant 0 : index
      %c0_18 = arith.constant 0 : index
      %19 = vector.load %arg10[%c0_16, %c0_17, %c0_18] : memref<4x8x32xf32, #tpu.memory_space<vmem>>, vector<4x8x32xf32>
      %20 = vector.broadcast %18 : vector<4x8x1xf32> to vector<4x8x32xf32>
      %21 = arith.mulf %19, %20 : vector<4x8x32xf32>
      %c0_19 = arith.constant 0 : index
      %c0_20 = arith.constant 0 : index
      %c0_21 = arith.constant 0 : index
      %22 = vector.load %arg6[%c0_19, %c0_20, %c0_21] : memref<4x8x32xf32, #tpu.memory_space<vmem>>, vector<4x8x32xf32>
      tpu.vector_store %arg6[%c0_19, %c0_20, %c0_21], %21 {strides = array<i32>} : memref<4x8x32xf32, #tpu.memory_space<vmem>>, vector<4x8x32xf32>,
    } else {
    }
    return
  }
  func.func @transform_0(%arg0: i32, %arg1: i32, %arg2: i32) -> (i32, i32, i32) {
    %c0_i32 = arith.constant 0 : i32
    %c0_i32_0 = arith.constant 0 : i32
    return %arg0, %arg1, %c0_i32 : i32, i32, i32
  }
  func.func @transform_1(%arg0: i32, %arg1: i32, %arg2: i32) -> (i32, i32, i32) {
    %c0_i32 = arith.constant 0 : i32
    %c0_i32_0 = arith.constant 0 : i32
    return %arg0, %arg2, %c0_i32 : i32, i32, i32
  }
  func.func @transform_2(%arg0: i32, %arg1: i32, %arg2: i32) -> (i32, i32, i32) {
    %c0_i32 = arith.constant 0 : i32
    %c0_i32_0 = arith.constant 0 : i32
    return %arg0, %arg2, %c0_i32 : i32, i32, i32
  }
  func.func @transform_3(%arg0: i32, %arg1: i32, %arg2: i32) -> (i32, i32, i32) {
    %c0_i32 = arith.constant 0 : i32
    %c0_i32_0 = arith.constant 0 : i32
    return %arg0, %arg1, %c0_i32 : i32, i32, i32
  }
}

</mosaic_0001>

<llo_original>
// kernel: tpu_custom_call.1
$region0: #{tpu_custom_call.1}
  #allocation0 [shape = 'u32[]', space=smem, size = 0x4, offset = 0x4, fixed_abs, tag = 'smem constant byte address 0x4 - core index']
  #allocation1 [shape = 'u32[144,128]{1,0:T(1,128)}', space=vmem, size = 0x12000, scoped, tag = 'internal scratch']
  #allocation2 [shape = 'bf16[4,8,32]{2,1,0:T(8,128)(2,1)}', space=vmem, size = 0x2000, scoped, tag = 'scratch operand']
  #allocation3 [shape = 'f32[4,8,1]{2,1,0:T(8,128)}', space=vmem, size = 0x4000, scoped, tag = 'scratch operand']
  #allocation4 [shape = 'f32[4,8,1]{2,1,0:T(8,128)}', space=vmem, size = 0x4000, scoped, tag = 'scratch operand']
  #allocation5 [shape = 'f32[4,8,32]{2,1,0:T(8,128)}', space=vmem, size = 0x4000, scoped, tag = 'scratch operand']
  %s0 = inlined_call_operand.hbm [shape: bf16[8,8,32], index: 0, kind: input, shape index: {}]
  %s1 = inlined_call_operand.hbm [shape: bf16[8,8,32], index: 1, kind: input, shape index: {}]
  %s2 = inlined_call_operand.hbm [shape: bf16[8,8,32], index: 2, kind: input, shape index: {}]
  %s3 = inlined_call_operand.hbm [shape: f32[8,8,32], index: 3, kind: output, shape index: {}]
  %s4 = sld [smem:[#allocation0]]
  $region73: #{tpu_custom_call.1} parent=0
    _
  %s6 = ssub.s32 1, %s4
  %s7 = scalar_select 0, %s6, %s4
  $region1: #{tpu_custom_call.1} parent=0
    #allocation6 [shape = 'u8[16384]{0}', space=vmem, size = 0x4000, scoped, tag = 'input window, operand 0']
    #allocation7 [shape = 's32[2]{0}', space=sflag, size = 0x8, scoped, tag = 'scoped memory for tpu_custom_call.1']
    #allocation8 [shape = 's32[2]{0}', space=sflag, size = 0x8, scoped, tag = 'scoped memory for tpu_custom_call.1']
    #allocation9 [shape = 'u8[16384]{0}', space=vmem, size = 0x4000, scoped, tag = 'input window, operand 1']
    #allocation10 [shape = 's32[2]{0}', space=sflag, size = 0x8, scoped, tag = 'scoped memory for tpu_custom_call.1']
    #allocation11 [shape = 'u8[16384]{0}', space=vmem, size = 0x4000, scoped, tag = 'input window, operand 2']
    #allocation12 [shape = 'u8[32768]{0}', space=vmem, size = 0x8000, scoped, tag = 'output window, operand 0']
    %8 = vsyncpa [#allocation7], 0
    %s9 = scalar_lea.sflag [#allocation7], 1
    %10 = vsyncpa %s9, 0
    %11 = vsyncpa [#allocation10], 0
    %s12 = scalar_lea.sflag [#allocation10], 1
    %13 = vsyncpa %s12, 0
    %14 = vsyncpa [#allocation8], 0
    %s15 = scalar_lea.sflag [#allocation8], 1
    %16 = vsyncpa %s15, 0
    loop: start=0, step=1, limit=4
    $region2: #{tpu_custom_call.1} parent=1 // loop_pre_header
      _
    $region3: #{tpu_custom_call.1} parent=1 // loop_header
      %s18 = sphi 0, %s22
      %p19 = scmp.ge.s32.totalorder %s18, 4
      %s25 = sphi 0, %s44
      %s26 = sphi 0, %s40
      %s27 = sphi 0, %s36
      %s28 = sphi 0, %s25
      %s29 = sphi 0, %s26
      %s30 = sphi 0, %s27
      %s31 = sphi 0, %s28
      %s32 = sphi 0, %s29
      %s33 = sphi 0, %s30
      %s49 = sphi 0, %s51
      %s52 = sphi 0, %s49
      %s53 = sphi 0, %s52
      %s69 = sphi 0, %s53
      %s77 = sphi 0, %s79
      %s80 = sphi 0, %s77
      %s81 = sphi 0, %s80
      %s97 = sphi 0, %s81
      %s105 = sphi 0, %s107
      %s108 = sphi 0, %s105
      %s109 = sphi 0, %s108
      %s125 = sphi 0, %s109
      %s133 = sphi 0, %s135
      %s136 = sphi 0, %s133
      %s137 = sphi 0, %s136
      %s153 = sphi 0, %s137
    $region4: #{tpu_custom_call.1} parent=1 // loop_header_branch
      %21 = sbr.rel (%p19) target = $region8
    $region5: #{tpu_custom_call.1} parent=1 // loop_body
      %s23 = ssub.s32 %s18, 1
      %s24 = ssub.s32 %s18, 2
      %s34 = sadd.s32 1, %s27
      %p35 = scmp.ge.s32.totalorder %s34, 1
      %s36 = scalar_select %p35, 0, %s34
      %s37 = sadd.s32 1, %s26
      %s38 = scalar_select %p35, %s37, %s26
      %p39 = scmp.ge.s32.totalorder %s38, 1
      %s40 = scalar_select %p39, 0, %s38
      %s41 = sadd.s32 1, %s25
      %s42 = scalar_select %p39, %s41, %s25
      %p43 = scmp.ge.s32.totalorder %s42, 2
      %s44 = scalar_select %p43, 0, %s42
      %s45 = ssub.s32 %s25, %s44
      %s46 = ssub.s32 %s26, %s40
      %s47 = sor.u32 %s45, %s46
      %p48 = scmp.eq.s32.totalorder %s47, 0
      %s50 = sadd.s32 %s49, 1
      %s51 = scalar_select %p48, %s49, %s50
      %p54 = pneg %p48
      %p55 = scmp.eq.s32.totalorder %s18, 1
      %p56 = por %p54, %p55
      %p57 = scmp.ne.s32.totalorder %s49, %s52
      %p58 = scmp.eq.s32.totalorder %s18, 0
      %p59 = por %p57, %p58
      %p60 = scmp.ne.s32.totalorder %s49, %s52
      %p61 = scmp.eq.s32.totalorder %s23, 1
      %p62 = por %p60, %p61
      %p63 = scmp.ne.s32.totalorder %s52, %s53
      %p64 = scmp.eq.s32.totalorder %s23, 0
      %p65 = por %p63, %p64
      %p66 = scmp.ne.s32.totalorder %s52, %s53
      %p67 = scmp.eq.s32.totalorder %s24, 1
      %p68 = por %p66, %p67
      %p70 = scmp.ne.s32.totalorder %s53, %s69
      %p71 = scmp.eq.s32.totalorder %s24, 0
      %p72 = por %p70, %p71
      %s73 = ssub.s32 %s25, %s44
      %s74 = ssub.s32 %s27, %s36
      %s75 = sor.u32 %s73, %s74
      %p76 = scmp.eq.s32.totalorder %s75, 0
      %s78 = sadd.s32 %s77, 1
      %s79 = scalar_select %p76, %s77, %s78
      %p82 = pneg %p76
      %p83 = scmp.eq.s32.totalorder %s18, 1
      %p84 = por %p82, %p83
      %p85 = scmp.ne.s32.totalorder %s77, %s80
      %p86 = scmp.eq.s32.totalorder %s18, 0
      %p87 = por %p85, %p86
      %p88 = scmp.ne.s32.totalorder %s77, %s80
      %p89 = scmp.eq.s32.totalorder %s23, 1
      %p90 = por %p88, %p89
      %p91 = scmp.ne.s32.totalorder %s80, %s81
      %p92 = scmp.eq.s32.totalorder %s23, 0
      %p93 = por %p91, %p92
      %p94 = scmp.ne.s32.totalorder %s80, %s81
      %p95 = scmp.eq.s32.totalorder %s24, 1
      %p96 = por %p94, %p95
      %p98 = scmp.ne.s32.totalorder %s81, %s97
      %p99 = scmp.eq.s32.totalorder %s24, 0
      %p100 = por %p98, %p99
      %s101 = ssub.s32 %s25, %s44
      %s102 = ssub.s32 %s27, %s36
      %s103 = sor.u32 %s101, %s102
      %p104 = scmp.eq.s32.totalorder %s103, 0
      %s106 = sadd.s32 %s105, 1
      %s107 = scalar_select %p104, %s105, %s106
      %p110 = pneg %p104
      %p111 = scmp.eq.s32.totalorder %s18, 1
      %p112 = por %p110, %p111
      %p113 = scmp.ne.s32.totalorder %s105, %s108
      %p114 = scmp.eq.s32.totalorder %s18, 0
      %p115 = por %p113, %p114
      %p116 = scmp.ne.s32.totalorder %s105, %s108
      %p117 = scmp.eq.s32.totalorder %s23, 1
      %p118 = por %p116, %p117
      %p119 = scmp.ne.s32.totalorder %s108, %s109
      %p120 = scmp.eq.s32.totalorder %s23, 0
      %p121 = por %p119, %p120
      %p122 = scmp.ne.s32.totalorder %s108, %s109
      %p123 = scmp.eq.s32.totalorder %s24, 1
      %p124 = por %p122, %p123
      %p126 = scmp.ne.s32.totalorder %s109, %s125
      %p127 = scmp.eq.s32.totalorder %s24, 0
      %p128 = por %p126, %p127
      %s129 = ssub.s32 %s25, %s44
      %s130 = ssub.s32 %s26, %s40
      %s131 = sor.u32 %s129, %s130
      %p132 = scmp.eq.s32.totalorder %s131, 0
      %s134 = sadd.s32 %s133, 1
      %s135 = scalar_select %p132, %s133, %s134
      %p138 = pneg %p132
      %p139 = scmp.eq.s32.totalorder %s18, 1
      %p140 = por %p138, %p139
      %p141 = scmp.ne.s32.totalorder %s133, %s136
      %p142 = scmp.eq.s32.totalorder %s18, 0
      %p143 = por %p141, %p142
      %p144 = scmp.ne.s32.totalorder %s133, %s136
      %p145 = scmp.eq.s32.totalorder %s23, 1
      %p146 = por %p144, %p145
      %p147 = scmp.ne.s32.totalorder %s136, %s137
      %p148 = scmp.eq.s32.totalorder %s23, 0
      %p149 = por %p147, %p148
      %p150 = scmp.ne.s32.totalorder %s136, %s137
      %p151 = scmp.eq.s32.totalorder %s24, 1
      %p152 = por %p150, %p151
      %p154 = scmp.ne.s32.totalorder %s137, %s153
      %p155 = scmp.eq.s32.totalorder %s24, 0
      %p156 = por %p154, %p155
      %p157 = scmp.le.s32.totalorder 1, %s18
      %p158 = scmp.lt.s32.totalorder %s18, 3
      %p159 = pnand %p157, %p158
      %p160 = pneg %p159
      // Predicated region
      $region9: #{tpu_custom_call.1} parent=5 // pred_check
        _
      $region10: #{tpu_custom_call.1} parent=5 // pred_check_branch
        %162 = sbr.rel (%p159) target = $region12
      $region11: #{tpu_custom_call.1} parent=5 // pred_region
        %s163 = ssub.s32 %s18, 1
      $region12: #{tpu_custom_call.1} parent=5 // pred_fallthru
        _
      %p164 = scmp.lt.s32.totalorder %s18, 2
      // Predicated region
      $region13: #{tpu_custom_call.1} parent=5 // pred_check
        %p165 = pneg %p164
      $region14: #{tpu_custom_call.1} parent=5 // pred_check_branch
        %167 = sbr.rel (%p165) target = $region16
      $region15: #{tpu_custom_call.1} parent=5 // pred_region
        // Predicated region
        $region17: #{tpu_custom_call.1} parent=15 // pred_check
          %p168 = pneg %p59
        $region18: #{tpu_custom_call.1} parent=15 // pred_check_branch
          %170 = sbr.rel (%p168) target = $region20
        $region19: #{tpu_custom_call.1} parent=15 // pred_region
          %s171 = sand.u32 %s49, 1
          %s172 = scalar_lea.sflag [#allocation7], %s171
          %s173 = sand.u32 %s49, 1
          %s174 = smul.addr %s173, 16
          %s175 = scalar_lea.vmem [#allocation6], %s174
          %s176 = smul.u32 4, %s25
          %s178 = ssub.s32 256, 256
          %179 = vsyncadd %s172, %s178
          %s180 = sadd.s32 %s26, %s176
          %s181 = smul.addr %s180, 64
          %s182 = scalar_lea.hbm %s0, %s181
          %s183 = sshll.u32 %s175, 4
          %s184 = int_to_ptr.vmem [resolvable:$true] %s183
          %189 = dma.hbm_to_vmem [thread:$0]  %s182, 256, %s184, %s172, 64, 64, 4
        $region20: #{tpu_custom_call.1} parent=15 // pred_fallthru
          _
        // Predicated region
        $region21: #{tpu_custom_call.1} parent=15 // pred_check
          %p190 = pneg %p87
        $region22: #{tpu_custom_call.1} parent=15 // pred_check_branch
          %192 = sbr.rel (%p190) target = $region24
        $region23: #{tpu_custom_call.1} parent=15 // pred_region
          %s193 = sand.u32 %s18, 1
          %s194 = scalar_lea.sflag [#allocation10], %s193
          %s195 = sand.u32 %s77, 1
          %s196 = smul.addr %s195, 16
          %s197 = scalar_lea.vmem [#allocation9], %s196
          %s198 = smul.u32 4, %s25
          %s200 = ssub.s32 256, 256
          %201 = vsyncadd %s194, %s200
          %s202 = sadd.s32 %s27, %s198
          %s203 = smul.addr %s202, 64
          %s204 = scalar_lea.hbm %s1, %s203
          %s205 = sshll.u32 %s197, 4
          %s206 = int_to_ptr.vmem [resolvable:$true] %s205
          %211 = dma.hbm_to_vmem [thread:$0]  %s204, 256, %s206, %s194, 64, 64, 4
        $region24: #{tpu_custom_call.1} parent=15 // pred_fallthru
          _
        // Predicated region
        $region25: #{tpu_custom_call.1} parent=15 // pred_check
          %p212 = pneg %p115
        $region26: #{tpu_custom_call.1} parent=15 // pred_check_branch
          %214 = sbr.rel (%p212) target = $region28
        $region27: #{tpu_custom_call.1} parent=15 // pred_region
          %s215 = sand.u32 %s18, 1
          %s216 = scalar_lea.sflag [#allocation10], %s215
          %s217 = sand.u32 %s105, 1
          %s218 = smul.addr %s217, 16
          %s219 = scalar_lea.vmem [#allocation11], %s218
          %s220 = smul.u32 4, %s25
          %s222 = ssub.s32 256, 256
          %223 = vsyncadd %s216, %s222
          %s224 = sadd.s32 %s27, %s220
          %s225 = smul.addr %s224, 64
          %s226 = scalar_lea.hbm %s2, %s225
          %s227 = sshll.u32 %s219, 4
          %s228 = int_to_ptr.vmem [resolvable:$true] %s227
          %233 = dma.hbm_to_vmem [thread:$0]  %s226, 256, %s228, %s216, 64, 64, 4
        $region28: #{tpu_custom_call.1} parent=15 // pred_fallthru
          _
      $region16: #{tpu_custom_call.1} parent=5 // pred_fallthru
        _
      %p234 = scmp.le.s32.totalorder 1, %s18
      %p235 = scmp.lt.s32.totalorder %s18, 3
      %p236 = pnand %p234, %p235
      %p237 = pneg %p236
      // Predicated region
      $region29: #{tpu_custom_call.1} parent=5 // pred_check
        _
      $region30: #{tpu_custom_call.1} parent=5 // pred_check_branch
        %239 = sbr.rel (%p236) target = $region32
      $region31: #{tpu_custom_call.1} parent=5 // pred_region
        %s240 = ssub.s32 %s18, 1
        %s241 = sand.u32 %s52, 1
        %s242 = scalar_lea.sflag [#allocation7], %s241
        %s243 = sand.u32 %s52, 1
        %s244 = smul.addr %s243, 16
        %s245 = scalar_lea.vmem [#allocation6], %s244
        // Predicated region
        $region33: #{tpu_custom_call.1} parent=31 // pred_check
          %p246 = pneg %p65
        $region34: #{tpu_custom_call.1} parent=31 // pred_check_branch
          %248 = sbr.rel (%p246) target = $region36
        $region35: #{tpu_custom_call.1} parent=31 // pred_region
          %249 = dma.done %s242, 256
        $region36: #{tpu_custom_call.1} parent=31 // pred_fallthru
          _
        %s250 = sand.u32 %s23, 1
        %s251 = scalar_lea.sflag [#allocation10], %s250
        %s252 = sand.u32 %s80, 1
        %s253 = smul.addr %s252, 16
        %s254 = scalar_lea.vmem [#allocation9], %s253
        // Predicated region
        $region37: #{tpu_custom_call.1} parent=31 // pred_check
          %p255 = pneg %p93
        $region38: #{tpu_custom_call.1} parent=31 // pred_check_branch
          %257 = sbr.rel (%p255) target = $region40
        $region39: #{tpu_custom_call.1} parent=31 // pred_region
          %258 = dma.done %s251, 256
        $region40: #{tpu_custom_call.1} parent=31 // pred_fallthru
          _
        %s259 = sand.u32 %s23, 1
        %s260 = scalar_lea.sflag [#allocation10], %s259
        %s261 = sand.u32 %s108, 1
        %s262 = smul.addr %s261, 16
        %s263 = scalar_lea.vmem [#allocation11], %s262
        // Predicated region
        $region41: #{tpu_custom_call.1} parent=31 // pred_check
          %p264 = pneg %p121
        $region42: #{tpu_custom_call.1} parent=31 // pred_check_branch
          %266 = sbr.rel (%p264) target = $region44
        $region43: #{tpu_custom_call.1} parent=31 // pred_region
          %267 = dma.done %s260, 256
        $region44: #{tpu_custom_call.1} parent=31 // pred_fallthru
          _
        %s268 = sand.u32 %s52, 1
        %s269 = scalar_lea.sflag [#allocation7], %s268
        %s270 = sand.u32 %s52, 1
        %s271 = smul.addr %s270, 16
        %s272 = scalar_lea.vmem [#allocation6], %s271
        %p273 = pneg %p65
        %p274 = pneg %p62
        %s275 = sand.u32 %s23, 1
        %s276 = scalar_lea.sflag [#allocation10], %s275
        %s277 = sand.u32 %s80, 1
        %s278 = smul.addr %s277, 16
        %s279 = scalar_lea.vmem [#allocation9], %s278
        %p280 = pneg %p93
        %p281 = pneg %p90
        %s282 = sand.u32 %s23, 1
        %s283 = scalar_lea.sflag [#allocation10], %s282
        %s284 = sand.u32 %s108, 1
        %s285 = smul.addr %s284, 16
        %s286 = scalar_lea.vmem [#allocation11], %s285
        %p287 = pneg %p121
        %p288 = pneg %p118
        %p289 = pneg %p149
        %p290 = pneg %p146
        %s291 = sand.u32 %s136, 1
        %s292 = scalar_lea.sflag [#allocation8], %s291
        %s293 = sand.u32 %s136, 1
        %s294 = smul.addr %s293, 32
        %s295 = scalar_lea.vmem [#allocation12], %s294
        %s296 = smul.u32 4, %s28
        %s297 = smul.u32 4, %s28
        %s298 = smul.u32 4, %s28
        %s299 = smul.u32 4, %s28
        %p302 = scmp.eq.s32.totalorder %s30, 0
        // Predicated region
        $region45: #{tpu_custom_call.1} parent=31 // pred_check
          %p303 = pneg %p302
        $region46: #{tpu_custom_call.1} parent=31 // pred_check_branch
          %305 = sbr.rel (%p303) target = $region48
        $region47: #{tpu_custom_call.1} parent=31 // pred_region
          %v306 = vld [vmem:[%s245] sm:$0xf]
          %v307 = vld [vmem:[%s245 + $0x4] sm:$0xf]
          %v308 = vld [vmem:[%s245 + $0x8] sm:$0xf]
          %v309 = vld [vmem:[%s245 + $0xc] sm:$0xf]
          %v310 = vmul.bf16 %v306, 1043676725
          %v311 = vmul.bf16 %v307, 1043676725
          %v312 = vmul.bf16 %v308, 1043676725
          %v313 = vmul.bf16 %v309, 1043676725
          %vm314 = vcmask 257024
          %315 = vst.msk [vmem:[#allocation2] sm:$0xf] %vm314, %v310
          %316 = vst.msk [vmem:[#allocation2 + $0x4] sm:$0xf] %vm314, %v311
          %317 = vst.msk [vmem:[#allocation2 + $0x8] sm:$0xf] %vm314, %v312
          %318 = vst.msk [vmem:[#allocation2 + $0xc] sm:$0xf] %vm314, %v313
        $region48: #{tpu_custom_call.1} parent=31 // pred_fallthru
          _
        %v319 = vld [vmem:[#allocation2] sm:$0xf]
        %v320 = vld [vmem:[#allocation2 + $0x4] sm:$0xf]
        %v321 = vld [vmem:[#allocation2 + $0x8] sm:$0xf]
        %v322 = vld [vmem:[#allocation2 + $0xc] sm:$0xf]
        %v323 = vld [vmem:[%s254] sm:$0xf]
        %v324 = vld [vmem:[%s254 + $0x4] sm:$0xf]
        %v325 = vld [vmem:[%s254 + $0x8] sm:$0xf]
        %v326 = vld [vmem:[%s254 + $0xc] sm:$0xf]
        %vm327 = vcmask 261120
        %v329 = vsel %vm327, %v319, 0
        %v332 = vsel %vm327, %v323, 0
        %334 = vmatprep.subr.bf16.mxu0 0
        %335 = vmatpush1.bf16.xpose.msra.mxu0 0
        %336 = vmatprep.subr.bf16.mxu0 0
        %337 = vmatpush1.bf16.xpose.msra.mxu0 0
        %338 = vmatprep.subr.bf16.mxu0 0
        %339 = vmatpush1.bf16.xpose.msra.mxu0 0
        %340 = vmatprep.subr.bf16.mxu0 0
        %341 = vmatpush1.bf16.xpose.msra.mxu0 0
        %342 = vmatprep.subr.bf16.mxu0 0
        %343 = vmatpush1.bf16.xpose.msra.mxu0 0
        %344 = vmatprep.subr.bf16.mxu0 0
        %345 = vmatpush1.bf16.xpose.msra.mxu0 0
        %346 = vmatprep.subr.bf16.mxu0 0
        %347 = vmatpush1.bf16.xpose.msra.mxu0 0
        %348 = vmatprep.subr.bf16.mxu0 0
        %349 = vmatpush1.bf16.xpose.msra.mxu0 %v332
        %350 = vmatprep.subr.bf16.mxu0 0
        %351 = vmatpush2.bf16.xpose.msra.mxu0 0
        %352 = vmatprep.subr.bf16.mxu0 0
        %353 = vmatpush2.bf16.xpose.msra.mxu0 0
        %354 = vmatprep.subr.bf16.mxu0 0
        %355 = vmatpush2.bf16.xpose.msra.mxu0 0
        %356 = vmatprep.subr.bf16.mxu0 0
        %357 = vmatpush2.bf16.xpose.msra.mxu0 0
        %358 = vmatprep.subr.bf16.mxu0 0
        %359 = vmatpush2.bf16.xpose.msra.mxu0 0
        %360 = vmatprep.subr.bf16.mxu0 0
        %361 = vmatpush2.bf16.xpose.msra.mxu0 0
        %362 = vmatprep.subr.bf16.mxu0 0
        %363 = vmatpush2.bf16.xpose.msra.mxu0 0
        %364 = vmatprep.subr.bf16.mxu0 0
        %365 = vmatpush2.bf16.xpose.msra.mxu0 0
        %366 = vmatprep.mubr.bf16.mxu0 0
        %367 = vmatmul.mubr.bf16.gmra.mxu0 %v329
        %v368 = vpop.f32.mrf.mxu0
        %v369 = vadd.f32 0.0, %v368
        %v370 = vpop.f32.mrf.mxu0
        %v371 = vpop.f32.mrf.mxu0
        %v372 = vpop.f32.mrf.mxu0
        %373 = vdwg.mxu0
        %v375 = vsel %vm327, %v320, 0
        %v378 = vsel %vm327, %v324, 0
        %380 = vmatprep.subr.bf16.mxu0 0
        %381 = vmatpush1.bf16.xpose.msra.mxu0 0
        %382 = vmatprep.subr.bf16.mxu0 0
        %383 = vmatpush1.bf16.xpose.msra.mxu0 0
        %384 = vmatprep.subr.bf16.mxu0 0
        %385 = vmatpush1.bf16.xpose.msra.mxu0 0
        %386 = vmatprep.subr.bf16.mxu0 0
        %387 = vmatpush1.bf16.xpose.msra.mxu0 0
        %388 = vmatprep.subr.bf16.mxu0 0
        %389 = vmatpush1.bf16.xpose.msra.mxu0 0
        %390 = vmatprep.subr.bf16.mxu0 0
        %391 = vmatpush1.bf16.xpose.msra.mxu0 0
        %392 = vmatprep.subr.bf16.mxu0 0
        %393 = vmatpush1.bf16.xpose.msra.mxu0 0
        %394 = vmatprep.subr.bf16.mxu0 0
        %395 = vmatpush1.bf16.xpose.msra.mxu0 %v378
        %396 = vmatprep.subr.bf16.mxu0 0
        %397 = vmatpush2.bf16.xpose.msra.mxu0 0
        %398 = vmatprep.subr.bf16.mxu0 0
        %399 = vmatpush2.bf16.xpose.msra.mxu0 0
        %400 = vmatprep.subr.bf16.mxu0 0
        %401 = vmatpush2.bf16.xpose.msra.mxu0 0
        %402 = vmatprep.subr.bf16.mxu0 0
        %403 = vmatpush2.bf16.xpose.msra.mxu0 0
        %404 = vmatprep.subr.bf16.mxu0 0
        %405 = vmatpush2.bf16.xpose.msra.mxu0 0
        %406 = vmatprep.subr.bf16.mxu0 0
        %407 = vmatpush2.bf16.xpose.msra.mxu0 0
        %408 = vmatprep.subr.bf16.mxu0 0
        %409 = vmatpush2.bf16.xpose.msra.mxu0 0
        %410 = vmatprep.subr.bf16.mxu0 0
        %411 = vmatpush2.bf16.xpose.msra.mxu0 0
        %412 = vmatprep.mubr.bf16.mxu0 0
        %413 = vmatmul.mubr.bf16.gmra.mxu0 %v375
        %v414 = vpop.f32.mrf.mxu0
        %v415 = vadd.f32 0.0, %v414
        %v416 = vpop.f32.mrf.mxu0
        %v417 = vpop.f32.mrf.mxu0
        %v418 = vpop.f32.mrf.mxu0
        %419 = vdwg.mxu0
        %v421 = vsel %vm327, %v321, 0
        %v424 = vsel %vm327, %v325, 0
        %426 = vmatprep.subr.bf16.mxu0 0
        %427 = vmatpush1.bf16.xpose.msra.mxu0 0
        %428 = vmatprep.subr.bf16.mxu0 0
        %429 = vmatpush1.bf16.xpose.msra.mxu0 0
        %430 = vmatprep.subr.bf16.mxu0 0
        %431 = vmatpush1.bf16.xpose.msra.mxu0 0
        %432 = vmatprep.subr.bf16.mxu0 0
        %433 = vmatpush1.bf16.xpose.msra.mxu0 0
        %434 = vmatprep.subr.bf16.mxu0 0
        %435 = vmatpush1.bf16.xpose.msra.mxu0 0
        %436 = vmatprep.subr.bf16.mxu0 0
        %437 = vmatpush1.bf16.xpose.msra.mxu0 0
        %438 = vmatprep.subr.bf16.mxu0 0
        %439 = vmatpush1.bf16.xpose.msra.mxu0 0
        %440 = vmatprep.subr.bf16.mxu0 0
        %441 = vmatpush1.bf16.xpose.msra.mxu0 %v424
        %442 = vmatprep.subr.bf16.mxu0 0
        %443 = vmatpush2.bf16.xpose.msra.mxu0 0
        %444 = vmatprep.subr.bf16.mxu0 0
        %445 = vmatpush2.bf16.xpose.msra.mxu0 0
        %446 = vmatprep.subr.bf16.mxu0 0
        %447 = vmatpush2.bf16.xpose.msra.mxu0 0
        %448 = vmatprep.subr.bf16.mxu0 0
        %449 = vmatpush2.bf16.xpose.msra.mxu0 0
        %450 = vmatprep.subr.bf16.mxu0 0
        %451 = vmatpush2.bf16.xpose.msra.mxu0 0
        %452 = vmatprep.subr.bf16.mxu0 0
        %453 = vmatpush2.bf16.xpose.msra.mxu0 0
        %454 = vmatprep.subr.bf16.mxu0 0
        %455 = vmatpush2.bf16.xpose.msra.mxu0 0
        %456 = vmatprep.subr.bf16.mxu0 0
        %457 = vmatpush2.bf16.xpose.msra.mxu0 0
        %458 = vmatprep.mubr.bf16.mxu0 0
        %459 = vmatmul.mubr.bf16.gmra.mxu0 %v421
        %v460 = vpop.f32.mrf.mxu0
        %v461 = vadd.f32 0.0, %v460
        %v462 = vpop.f32.mrf.mxu0
        %v463 = vpop.f32.mrf.mxu0
        %v464 = vpop.f32.mrf.mxu0
        %465 = vdwg.mxu0
        %v467 = vsel %vm327, %v322, 0
        %v470 = vsel %vm327, %v326, 0
        %472 = vmatprep.subr.bf16.mxu0 0
        %473 = vmatpush1.bf16.xpose.msra.mxu0 0
        %474 = vmatprep.subr.bf16.mxu0 0
        %475 = vmatpush1.bf16.xpose.msra.mxu0 0
        %476 = vmatprep.subr.bf16.mxu0 0
        %477 = vmatpush1.bf16.xpose.msra.mxu0 0
        %478 = vmatprep.subr.bf16.mxu0 0
        %479 = vmatpush1.bf16.xpose.msra.mxu0 0
        %480 = vmatprep.subr.bf16.mxu0 0
        %481 = vmatpush1.bf16.xpose.msra.mxu0 0
        %482 = vmatprep.subr.bf16.mxu0 0
        %483 = vmatpush1.bf16.xpose.msra.mxu0 0
        %484 = vmatprep.subr.bf16.mxu0 0
        %485 = vmatpush1.bf16.xpose.msra.mxu0 0
        %486 = vmatprep.subr.bf16.mxu0 0
        %487 = vmatpush1.bf16.xpose.msra.mxu0 %v470
        %488 = vmatprep.subr.bf16.mxu0 0
        %489 = vmatpush2.bf16.xpose.msra.mxu0 0
        %490 = vmatprep.subr.bf16.mxu0 0
        %491 = vmatpush2.bf16.xpose.msra.mxu0 0
        %492 = vmatprep.subr.bf16.mxu0 0
        %493 = vmatpush2.bf16.xpose.msra.mxu0 0
        %494 = vmatprep.subr.bf16.mxu0 0
        %495 = vmatpush2.bf16.xpose.msra.mxu0 0
        %496 = vmatprep.subr.bf16.mxu0 0
        %497 = vmatpush2.bf16.xpose.msra.mxu0 0
        %498 = vmatprep.subr.bf16.mxu0 0
        %499 = vmatpush2.bf16.xpose.msra.mxu0 0
        %500 = vmatprep.subr.bf16.mxu0 0
        %501 = vmatpush2.bf16.xpose.msra.mxu0 0
        %502 = vmatprep.subr.bf16.mxu0 0
        %503 = vmatpush2.bf16.xpose.msra.mxu0 0
        %504 = vmatprep.mubr.bf16.mxu0 0
        %505 = vmatmul.mubr.bf16.gmra.mxu0 %v467
        %v506 = vpop.f32.mrf.mxu0
        %v507 = vadd.f32 0.0, %v506
        %v508 = vpop.f32.mrf.mxu0
        %v509 = vpop.f32.mrf.mxu0
        %v510 = vpop.f32.mrf.mxu0
        %511 = vdwg.mxu0
        %vm512 = vcmask 64512
        %v513 = vsel %vm512, %v369, -inf
        %514 = vmax.xlane.f32.xlu0 %v513
        %v515 = vpop.xlane.xlu0 %514
        %v516 = vsel %vm512, %v415, -inf
        %517 = vmax.xlane.f32.xlu0 %v516
        %v518 = vpop.xlane.xlu0 %517
        %v519 = vsel %vm512, %v461, -inf
        %520 = vmax.xlane.f32.xlu0 %v519
        %v521 = vpop.xlane.xlu0 %520
        %v522 = vsel %vm512, %v507, -inf
        %523 = vmax.xlane.f32.xlu0 %v522
        %v524 = vpop.xlane.xlu0 %523
        // Predicated region
        $region49: #{tpu_custom_call.1} parent=31 // pred_check
          %p525 = pneg %p302
        $region50: #{tpu_custom_call.1} parent=31 // pred_check_branch
          %527 = sbr.rel (%p525) target = $region52
        $region51: #{tpu_custom_call.1} parent=31 // pred_region
          %v528 = vsub.f32 %v369, %v515
          %v529 = vsub.f32 %v415, %v518
          %v530 = vsub.f32 %v461, %v521
          %v531 = vsub.f32 %v507, %v524
          %v532 = vmul.f32 %v528, 1.442695
          %v533 = vpow.pop %v532
          %v534 = vmul.f32 %v529, 1.442695
          %v535 = vpow.pop %v534
          %v536 = vmul.f32 %v530, 1.442695
          %v537 = vpow.pop %v536
          %v538 = vmul.f32 %v531, 1.442695
          %v539 = vpow.pop %v538
          %vm540 = vcmask 7168
          %541 = vst.msk [vmem:[#allocation3] sm:$0xff] %vm540, %v515
          %542 = vst.msk [vmem:[#allocation3 + $0x8] sm:$0xff] %vm540, %v518
          %543 = vst.msk [vmem:[#allocation3 + $0x10] sm:$0xff] %vm540, %v521
          %544 = vst.msk [vmem:[#allocation3 + $0x18] sm:$0xff] %vm540, %v524
          %v545 = vsel %vm512, %v533, 0.0
          %546 = vadd.xlane.f32.xlu0 %v545
          %v547 = vpop.xlane.xlu0 %546
          %v548 = vsel %vm512, %v535, 0.0
          %549 = vadd.xlane.f32.xlu0 %v548
          %v550 = vpop.xlane.xlu0 %549
          %v551 = vsel %vm512, %v537, 0.0
          %552 = vadd.xlane.f32.xlu0 %v551
          %v553 = vpop.xlane.xlu0 %552
          %v554 = vsel %vm512, %v539, 0.0
          %555 = vadd.xlane.f32.xlu0 %v554
          %v556 = vpop.xlane.xlu0 %555
          %557 = vst.msk [vmem:[#allocation4] sm:$0xff] %vm540, %v547
          %558 = vst.msk [vmem:[#allocation4 + $0x8] sm:$0xff] %vm540, %v550
          %559 = vst.msk [vmem:[#allocation4 + $0x10] sm:$0xff] %vm540, %v553
          %560 = vst.msk [vmem:[#allocation4 + $0x18] sm:$0xff] %vm540, %v556
          %v561 = vpack.c.bf16 %v533, %v533
          %v562 = vpack.c.bf16 %v535, %v535
          %v563 = vpack.c.bf16 %v537, %v537
          %v564 = vpack.c.bf16 %v539, %v539
          %v565 = vld [vmem:[%s263] sm:$0xf]
          %v566 = vld [vmem:[%s263 + $0x4] sm:$0xf]
          %v567 = vld [vmem:[%s263 + $0x8] sm:$0xf]
          %v568 = vld [vmem:[%s263 + $0xc] sm:$0xf]
          %v570 = vsel %vm512, %v561, 0
          %vm572 = vcmask 1043456
          %v574 = vsel %vm572, %v565, 0
          %576 = vmatprep.subr.bf16.mxu0 0
          %577 = vmatpush1.bf16.msra.mxu0 0
          %578 = vmatprep.subr.bf16.mxu0 0
          %579 = vmatpush1.bf16.msra.mxu0 0
          %580 = vmatprep.subr.bf16.mxu0 0
          %581 = vmatpush1.bf16.msra.mxu0 0
          %582 = vmatprep.subr.bf16.mxu0 0
          %583 = vmatpush1.bf16.msra.mxu0 0
          %584 = vmatprep.subr.bf16.mxu0 0
          %585 = vmatpush1.bf16.msra.mxu0 0
          %586 = vmatprep.subr.bf16.mxu0 0
          %587 = vmatpush1.bf16.msra.mxu0 0
          %588 = vmatprep.subr.bf16.mxu0 0
          %589 = vmatpush1.bf16.msra.mxu0 0
          %590 = vmatprep.subr.bf16.mxu0 0
          %591 = vmatpush1.bf16.msra.mxu0 %v574
          %592 = vmatprep.subr.bf16.mxu0 0
          %593 = vmatpush2.bf16.msra.mxu0 0
          %594 = vmatprep.subr.bf16.mxu0 0
          %595 = vmatpush2.bf16.msra.mxu0 0
          %596 = vmatprep.subr.bf16.mxu0 0
          %597 = vmatpush2.bf16.msra.mxu0 0
          %598 = vmatprep.subr.bf16.mxu0 0
          %599 = vmatpush2.bf16.msra.mxu0 0
          %600 = vmatprep.subr.bf16.mxu0 0
          %601 = vmatpush2.bf16.msra.mxu0 0
          %602 = vmatprep.subr.bf16.mxu0 0
          %603 = vmatpush2.bf16.msra.mxu0 0
          %604 = vmatprep.subr.bf16.mxu0 0
          %605 = vmatpush2.bf16.msra.mxu0 0
          %606 = vmatprep.subr.bf16.mxu0 0
          %607 = vmatpush2.bf16.msra.mxu0 0
          %608 = vmatprep.mubr.bf16.mxu0 0
          %609 = vmatmul.mubr.bf16.gmra.mxu0 %v570
          %v610 = vpop.f32.mrf.mxu0
          %v611 = vadd.f32 0.0, %v610
          %v612 = vpop.f32.mrf.mxu0
          %v613 = vpop.f32.mrf.mxu0
          %v614 = vpop.f32.mrf.mxu0
          %615 = vdwg.mxu0
          %v617 = vsel %vm512, %v562, 0
          %v620 = vsel %vm572, %v566, 0
          %622 = vmatprep.subr.bf16.mxu0 0
          %623 = vmatpush1.bf16.msra.mxu0 0
          %624 = vmatprep.subr.bf16.mxu0 0
          %625 = vmatpush1.bf16.msra.mxu0 0
          %626 = vmatprep.subr.bf16.mxu0 0
          %627 = vmatpush1.bf16.msra.mxu0 0
          %628 = vmatprep.subr.bf16.mxu0 0
          %629 = vmatpush1.bf16.msra.mxu0 0
          %630 = vmatprep.subr.bf16.mxu0 0
          %631 = vmatpush1.bf16.msra.mxu0 0
          %632 = vmatprep.subr.bf16.mxu0 0
          %633 = vmatpush1.bf16.msra.mxu0 0
          %634 = vmatprep.subr.bf16.mxu0 0
          %635 = vmatpush1.bf16.msra.mxu0 0
          %636 = vmatprep.subr.bf16.mxu0 0
          %637 = vmatpush1.bf16.msra.mxu0 %v620
          %638 = vmatprep.subr.bf16.mxu0 0
          %639 = vmatpush2.bf16.msra.mxu0 0
          %640 = vmatprep.subr.bf16.mxu0 0
          %641 = vmatpush2.bf16.msra.mxu0 0
          %642 = vmatprep.subr.bf16.mxu0 0
          %643 = vmatpush2.bf16.msra.mxu0 0
          %644 = vmatprep.subr.bf16.mxu0 0
          %645 = vmatpush2.bf16.msra.mxu0 0
          %646 = vmatprep.subr.bf16.mxu0 0
          %647 = vmatpush2.bf16.msra.mxu0 0
          %648 = vmatprep.subr.bf16.mxu0 0
          %649 = vmatpush2.bf16.msra.mxu0 0
          %650 = vmatprep.subr.bf16.mxu0 0
          %651 = vmatpush2.bf16.msra.mxu0 0
          %652 = vmatprep.subr.bf16.mxu0 0
          %653 = vmatpush2.bf16.msra.mxu0 0
          %654 = vmatprep.mubr.bf16.mxu0 0
          %655 = vmatmul.mubr.bf16.gmra.mxu0 %v617
          %v656 = vpop.f32.mrf.mxu0
          %v657 = vadd.f32 0.0, %v656
          %v658 = vpop.f32.mrf.mxu0
          %v659 = vpop.f32.mrf.mxu0
          %v660 = vpop.f32.mrf.mxu0
          %661 = vdwg.mxu0
          %v663 = vsel %vm512, %v563, 0
          %v666 = vsel %vm572, %v567, 0
          %668 = vmatprep.subr.bf16.mxu0 0
          %669 = vmatpush1.bf16.msra.mxu0 0
          %670 = vmatprep.subr.bf16.mxu0 0
          %671 = vmatpush1.bf16.msra.mxu0 0
          %672 = vmatprep.subr.bf16.mxu0 0
          %673 = vmatpush1.bf16.msra.mxu0 0
          %674 = vmatprep.subr.bf16.mxu0 0
          %675 = vmatpush1.bf16.msra.mxu0 0
          %676 = vmatprep.subr.bf16.mxu0 0
          %677 = vmatpush1.bf16.msra.mxu0 0
          %678 = vmatprep.subr.bf16.mxu0 0
          %679 = vmatpush1.bf16.msra.mxu0 0
          %680 = vmatprep.subr.bf16.mxu0 0
          %681 = vmatpush1.bf16.msra.mxu0 0
          %682 = vmatprep.subr.bf16.mxu0 0
          %683 = vmatpush1.bf16.msra.mxu0 %v666
          %684 = vmatprep.subr.bf16.mxu0 0
          %685 = vmatpush2.bf16.msra.mxu0 0
          %686 = vmatprep.subr.bf16.mxu0 0
          %687 = vmatpush2.bf16.msra.mxu0 0
          %688 = vmatprep.subr.bf16.mxu0 0
          %689 = vmatpush2.bf16.msra.mxu0 0
          %690 = vmatprep.subr.bf16.mxu0 0
          %691 = vmatpush2.bf16.msra.mxu0 0
          %692 = vmatprep.subr.bf16.mxu0 0
          %693 = vmatpush2.bf16.msra.mxu0 0
          %694 = vmatprep.subr.bf16.mxu0 0
          %695 = vmatpush2.bf16.msra.mxu0 0
          %696 = vmatprep.subr.bf16.mxu0 0
          %697 = vmatpush2.bf16.msra.mxu0 0
          %698 = vmatprep.subr.bf16.mxu0 0
          %699 = vmatpush2.bf16.msra.mxu0 0
          %700 = vmatprep.mubr.bf16.mxu0 0
          %701 = vmatmul.mubr.bf16.gmra.mxu0 %v663
          %v702 = vpop.f32.mrf.mxu0
          %v703 = vadd.f32 0.0, %v702
          %v704 = vpop.f32.mrf.mxu0
          %v705 = vpop.f32.mrf.mxu0
          %v706 = vpop.f32.mrf.mxu0
          %707 = vdwg.mxu0
          %v709 = vsel %vm512, %v564, 0
          %v712 = vsel %vm572, %v568, 0
          %714 = vmatprep.subr.bf16.mxu0 0
          %715 = vmatpush1.bf16.msra.mxu0 0
          %716 = vmatprep.subr.bf16.mxu0 0
          %717 = vmatpush1.bf16.msra.mxu0 0
          %718 = vmatprep.subr.bf16.mxu0 0
          %719 = vmatpush1.bf16.msra.mxu0 0
          %720 = vmatprep.subr.bf16.mxu0 0
          %721 = vmatpush1.bf16.msra.mxu0 0
          %722 = vmatprep.subr.bf16.mxu0 0
          %723 = vmatpush1.bf16.msra.mxu0 0
          %724 = vmatprep.subr.bf16.mxu0 0
          %725 = vmatpush1.bf16.msra.mxu0 0
          %726 = vmatprep.subr.bf16.mxu0 0
          %727 = vmatpush1.bf16.msra.mxu0 0
          %728 = vmatprep.subr.bf16.mxu0 0
          %729 = vmatpush1.bf16.msra.mxu0 %v712
          %730 = vmatprep.subr.bf16.mxu0 0
          %731 = vmatpush2.bf16.msra.mxu0 0
          %732 = vmatprep.subr.bf16.mxu0 0
          %733 = vmatpush2.bf16.msra.mxu0 0
          %734 = vmatprep.subr.bf16.mxu0 0
          %735 = vmatpush2.bf16.msra.mxu0 0
          %736 = vmatprep.subr.bf16.mxu0 0
          %737 = vmatpush2.bf16.msra.mxu0 0
          %738 = vmatprep.subr.bf16.mxu0 0
          %739 = vmatpush2.bf16.msra.mxu0 0
          %740 = vmatprep.subr.bf16.mxu0 0
          %741 = vmatpush2.bf16.msra.mxu0 0
          %742 = vmatprep.subr.bf16.mxu0 0
          %743 = vmatpush2.bf16.msra.mxu0 0
          %744 = vmatprep.subr.bf16.mxu0 0
          %745 = vmatpush2.bf16.msra.mxu0 0
          %746 = vmatprep.mubr.bf16.mxu0 0
          %747 = vmatmul.mubr.bf16.gmra.mxu0 %v709
          %v748 = vpop.f32.mrf.mxu0
          %v749 = vadd.f32 0.0, %v748
          %v750 = vpop.f32.mrf.mxu0
          %v751 = vpop.f32.mrf.mxu0
          %v752 = vpop.f32.mrf.mxu0
          %753 = vdwg.mxu0
          %754 = vst.msk [vmem:[#allocation5] sm:$0xff] %vm327, %v611
          %755 = vst.msk [vmem:[#allocation5 + $0x8] sm:$0xff] %vm327, %v657
          %756 = vst.msk [vmem:[#allocation5 + $0x10] sm:$0xff] %vm327, %v703
          %757 = vst.msk [vmem:[#allocation5 + $0x18] sm:$0xff] %vm327, %v749
        $region52: #{tpu_custom_call.1} parent=31 // pred_fallthru
          _
        %p758 = scmp.gt.s32.totalorder %s30, 0
        // Predicated region
        $region53: #{tpu_custom_call.1} parent=31 // pred_check
          %p759 = pneg %p758
        $region54: #{tpu_custom_call.1} parent=31 // pred_check_branch
          %761 = sbr.rel (%p759) target = $region56
        $region55: #{tpu_custom_call.1} parent=31 // pred_region
          %v762 = vld [vmem:[#allocation3] sm:$0xff]
          %v763 = vld [vmem:[#allocation3 + $0x8] sm:$0xff]
          %v764 = vld [vmem:[#allocation3 + $0x10] sm:$0xff]
          %v765 = vld [vmem:[#allocation3 + $0x18] sm:$0xff]
          %v766 = vmax.f32 %v762, %v515
          %v767 = vmax.f32 %v763, %v518
          %v768 = vmax.f32 %v764, %v521
          %v769 = vmax.f32 %v765, %v524
          %v770 = vsub.f32 %v762, %v766
          %v771 = vsub.f32 %v763, %v767
          %v772 = vsub.f32 %v764, %v768
          %v773 = vsub.f32 %v765, %v769
          %v774 = vmul.f32 %v770, 1.442695
          %v775 = vpow.pop %v774
          %v776 = vmul.f32 %v771, 1.442695
          %v777 = vpow.pop %v776
          %v778 = vmul.f32 %v772, 1.442695
          %v779 = vpow.pop %v778
          %v780 = vmul.f32 %v773, 1.442695
          %v781 = vpow.pop %v780
          %783 = vset.pattern.permute.xlu0 0
          %784 = vperm.xlu0 %783, %v766
          %v785 = vpop.permute.xlu0 %784
          %788 = vset.pattern.permute.xlu0 0
          %789 = vperm.xlu0 %788, %v767
          %v790 = vpop.permute.xlu0 %789
          %793 = vset.pattern.permute.xlu0 0
          %794 = vperm.xlu0 %793, %v768
          %v795 = vpop.permute.xlu0 %794
          %798 = vset.pattern.permute.xlu0 0
          %799 = vperm.xlu0 %798, %v769
          %v800 = vpop.permute.xlu0 %799
          %v802 = vsub.f32 %v369, %v785
          %v803 = vsub.f32 %v415, %v790
          %v804 = vsub.f32 %v461, %v795
          %v805 = vsub.f32 %v507, %v800
          %v806 = vmul.f32 %v802, 1.442695
          %v807 = vpow.pop %v806
          %v808 = vmul.f32 %v803, 1.442695
          %v809 = vpow.pop %v808
          %v810 = vmul.f32 %v804, 1.442695
          %v811 = vpow.pop %v810
          %v812 = vmul.f32 %v805, 1.442695
          %v813 = vpow.pop %v812
          %v814 = vld [vmem:[#allocation4] sm:$0xff]
          %v815 = vld [vmem:[#allocation4 + $0x8] sm:$0xff]
          %v816 = vld [vmem:[#allocation4 + $0x10] sm:$0xff]
          %v817 = vld [vmem:[#allocation4 + $0x18] sm:$0xff]
          %v818 = vmul.f32 %v775, %v814
          %v819 = vmul.f32 %v777, %v815
          %v820 = vmul.f32 %v779, %v816
          %v821 = vmul.f32 %v781, %v817
          %v822 = vsel %vm512, %v807, 0.0
          %823 = vadd.xlane.f32.xlu0 %v822
          %v824 = vpop.xlane.xlu0 %823
          %v825 = vsel %vm512, %v809, 0.0
          %826 = vadd.xlane.f32.xlu0 %v825
          %v827 = vpop.xlane.xlu0 %826
          %v828 = vsel %vm512, %v811, 0.0
          %829 = vadd.xlane.f32.xlu0 %v828
          %v830 = vpop.xlane.xlu0 %829
          %v831 = vsel %vm512, %v813, 0.0
          %832 = vadd.xlane.f32.xlu0 %v831
          %v833 = vpop.xlane.xlu0 %832
          %v834 = vadd.f32 %v818, %v824
          %v835 = vadd.f32 %v819, %v827
          %v836 = vadd.f32 %v820, %v830
          %v837 = vadd.f32 %v821, %v833
          %vm838 = vcmask 7168
          %839 = vst.msk [vmem:[#allocation4] sm:$0xff] %vm838, %v834
          %840 = vst.msk [vmem:[#allocation4 + $0x8] sm:$0xff] %vm838, %v835
          %841 = vst.msk [vmem:[#allocation4 + $0x10] sm:$0xff] %vm838, %v836
          %842 = vst.msk [vmem:[#allocation4 + $0x18] sm:$0xff] %vm838, %v837
          %v843 = vld [vmem:[#allocation5] sm:$0xff]
          %v844 = vld [vmem:[#allocation5 + $0x8] sm:$0xff]
          %v845 = vld [vmem:[#allocation5 + $0x10] sm:$0xff]
          %v846 = vld [vmem:[#allocation5 + $0x18] sm:$0xff]
          %848 = vset.pattern.permute.xlu0 0
          %849 = vperm.xlu0 %848, %v775
          %v850 = vpop.permute.xlu0 %849
          %853 = vset.pattern.permute.xlu0 0
          %854 = vperm.xlu0 %853, %v777
          %v855 = vpop.permute.xlu0 %854
          %858 = vset.pattern.permute.xlu0 0
          %859 = vperm.xlu0 %858, %v779
          %v860 = vpop.permute.xlu0 %859
          %863 = vset.pattern.permute.xlu0 0
          %864 = vperm.xlu0 %863, %v781
          %v865 = vpop.permute.xlu0 %864
          %v867 = vmul.f32 %v850, %v843
          %v868 = vmul.f32 %v855, %v844
          %v869 = vmul.f32 %v860, %v845
          %v870 = vmul.f32 %v865, %v846
          %v871 = vpack.c.bf16 %v807, %v807
          %v872 = vpack.c.bf16 %v809, %v809
          %v873 = vpack.c.bf16 %v811, %v811
          %v874 = vpack.c.bf16 %v813, %v813
          %v875 = vld [vmem:[%s263] sm:$0xf]
          %v876 = vld [vmem:[%s263 + $0x4] sm:$0xf]
          %v877 = vld [vmem:[%s263 + $0x8] sm:$0xf]
          %v878 = vld [vmem:[%s263 + $0xc] sm:$0xf]
          %v880 = vsel %vm512, %v871, 0
          %vm882 = vcmask 1043456
          %v884 = vsel %vm882, %v875, 0
          %886 = vmatprep.subr.bf16.mxu0 0
          %887 = vmatpush1.bf16.msra.mxu0 0
          %888 = vmatprep.subr.bf16.mxu0 0
          %889 = vmatpush1.bf16.msra.mxu0 0
          %890 = vmatprep.subr.bf16.mxu0 0
          %891 = vmatpush1.bf16.msra.mxu0 0
          %892 = vmatprep.subr.bf16.mxu0 0
          %893 = vmatpush1.bf16.msra.mxu0 0
          %894 = vmatprep.subr.bf16.mxu0 0
          %895 = vmatpush1.bf16.msra.mxu0 0
          %896 = vmatprep.subr.bf16.mxu0 0
          %897 = vmatpush1.bf16.msra.mxu0 0
          %898 = vmatprep.subr.bf16.mxu0 0
          %899 = vmatpush1.bf16.msra.mxu0 0
          %900 = vmatprep.subr.bf16.mxu0 0
          %901 = vmatpush1.bf16.msra.mxu0 %v884
          %902 = vmatprep.subr.bf16.mxu0 0
          %903 = vmatpush2.bf16.msra.mxu0 0
          %904 = vmatprep.subr.bf16.mxu0 0
          %905 = vmatpush2.bf16.msra.mxu0 0
          %906 = vmatprep.subr.bf16.mxu0 0
          %907 = vmatpush2.bf16.msra.mxu0 0
          %908 = vmatprep.subr.bf16.mxu0 0
          %909 = vmatpush2.bf16.msra.mxu0 0
          %910 = vmatprep.subr.bf16.mxu0 0
          %911 = vmatpush2.bf16.msra.mxu0 0
          %912 = vmatprep.subr.bf16.mxu0 0
          %913 = vmatpush2.bf16.msra.mxu0 0
          %914 = vmatprep.subr.bf16.mxu0 0
          %915 = vmatpush2.bf16.msra.mxu0 0
          %916 = vmatprep.subr.bf16.mxu0 0
          %917 = vmatpush2.bf16.msra.mxu0 0
          %918 = vmatprep.mubr.bf16.mxu0 0
          %919 = vmatmul.mubr.bf16.gmra.mxu0 %v880
          %v920 = vpop.f32.mrf.mxu0
          %v921 = vadd.f32 0.0, %v920
          %v922 = vpop.f32.mrf.mxu0
          %v923 = vpop.f32.mrf.mxu0
          %v924 = vpop.f32.mrf.mxu0
          %925 = vdwg.mxu0
          %v927 = vsel %vm512, %v872, 0
          %v930 = vsel %vm882, %v876, 0
          %932 = vmatprep.subr.bf16.mxu0 0
          %933 = vmatpush1.bf16.msra.mxu0 0
          %934 = vmatprep.subr.bf16.mxu0 0
          %935 = vmatpush1.bf16.msra.mxu0 0
          %936 = vmatprep.subr.bf16.mxu0 0
          %937 = vmatpush1.bf16.msra.mxu0 0
          %938 = vmatprep.subr.bf16.mxu0 0
          %939 = vmatpush1.bf16.msra.mxu0 0
          %940 = vmatprep.subr.bf16.mxu0 0
          %941 = vmatpush1.bf16.msra.mxu0 0
          %942 = vmatprep.subr.bf16.mxu0 0
          %943 = vmatpush1.bf16.msra.mxu0 0
          %944 = vmatprep.subr.bf16.mxu0 0
          %945 = vmatpush1.bf16.msra.mxu0 0
          %946 = vmatprep.subr.bf16.mxu0 0
          %947 = vmatpush1.bf16.msra.mxu0 %v930
          %948 = vmatprep.subr.bf16.mxu0 0
          %949 = vmatpush2.bf16.msra.mxu0 0
          %950 = vmatprep.subr.bf16.mxu0 0
          %951 = vmatpush2.bf16.msra.mxu0 0
          %952 = vmatprep.subr.bf16.mxu0 0
          %953 = vmatpush2.bf16.msra.mxu0 0
          %954 = vmatprep.subr.bf16.mxu0 0
          %955 = vmatpush2.bf16.msra.mxu0 0
          %956 = vmatprep.subr.bf16.mxu0 0
          %957 = vmatpush2.bf16.msra.mxu0 0
          %958 = vmatprep.subr.bf16.mxu0 0
          %959 = vmatpush2.bf16.msra.mxu0 0
          %960 = vmatprep.subr.bf16.mxu0 0
          %961 = vmatpush2.bf16.msra.mxu0 0
          %962 = vmatprep.subr.bf16.mxu0 0
          %963 = vmatpush2.bf16.msra.mxu0 0
          %964 = vmatprep.mubr.bf16.mxu0 0
          %965 = vmatmul.mubr.bf16.gmra.mxu0 %v927
          %v966 = vpop.f32.mrf.mxu0
          %v967 = vadd.f32 0.0, %v966
          %v968 = vpop.f32.mrf.mxu0
          %v969 = vpop.f32.mrf.mxu0
          %v970 = vpop.f32.mrf.mxu0
          %971 = vdwg.mxu0
          %v973 = vsel %vm512, %v873, 0
          %v976 = vsel %vm882, %v877, 0
          %978 = vmatprep.subr.bf16.mxu0 0
          %979 = vmatpush1.bf16.msra.mxu0 0
          %980 = vmatprep.subr.bf16.mxu0 0
          %981 = vmatpush1.bf16.msra.mxu0 0
          %982 = vmatprep.subr.bf16.mxu0 0
          %983 = vmatpush1.bf16.msra.mxu0 0
          %984 = vmatprep.subr.bf16.mxu0 0
          %985 = vmatpush1.bf16.msra.mxu0 0
          %986 = vmatprep.subr.bf16.mxu0 0
          %987 = vmatpush1.bf16.msra.mxu0 0
          %988 = vmatprep.subr.bf16.mxu0 0
          %989 = vmatpush1.bf16.msra.mxu0 0
          %990 = vmatprep.subr.bf16.mxu0 0
          %991 = vmatpush1.bf16.msra.mxu0 0
          %992 = vmatprep.subr.bf16.mxu0 0
          %993 = vmatpush1.bf16.msra.mxu0 %v976
          %994 = vmatprep.subr.bf16.mxu0 0
          %995 = vmatpush2.bf16.msra.mxu0 0
          %996 = vmatprep.subr.bf16.mxu0 0
          %997 = vmatpush2.bf16.msra.mxu0 0
          %998 = vmatprep.subr.bf16.mxu0 0
          %999 = vmatpush2.bf16.msra.mxu0 0
          %1000 = vmatprep.subr.bf16.mxu0 0
          %1001 = vmatpush2.bf16.msra.mxu0 0
          %1002 = vmatprep.subr.bf16.mxu0 0
          %1003 = vmatpush2.bf16.msra.mxu0 0
          %1004 = vmatprep.subr.bf16.mxu0 0
          %1005 = vmatpush2.bf16.msra.mxu0 0
          %1006 = vmatprep.subr.bf16.mxu0 0
          %1007 = vmatpush2.bf16.msra.mxu0 0
          %1008 = vmatprep.subr.bf16.mxu0 0
          %1009 = vmatpush2.bf16.msra.mxu0 0
          %1010 = vmatprep.mubr.bf16.mxu0 0
          %1011 = vmatmul.mubr.bf16.gmra.mxu0 %v973
          %v1012 = vpop.f32.mrf.mxu0
          %v1013 = vadd.f32 0.0, %v1012
          %v1014 = vpop.f32.mrf.mxu0
          %v1015 = vpop.f32.mrf.mxu0
          %v1016 = vpop.f32.mrf.mxu0
          %1017 = vdwg.mxu0
          %v1019 = vsel %vm512, %v874, 0
          %v1022 = vsel %vm882, %v878, 0
          %1024 = vmatprep.subr.bf16.mxu0 0
          %1025 = vmatpush1.bf16.msra.mxu0 0
          %1026 = vmatprep.subr.bf16.mxu0 0
          %1027 = vmatpush1.bf16.msra.mxu0 0
          %1028 = vmatprep.subr.bf16.mxu0 0
          %1029 = vmatpush1.bf16.msra.mxu0 0
          %1030 = vmatprep.subr.bf16.mxu0 0
          %1031 = vmatpush1.bf16.msra.mxu0 0
          %1032 = vmatprep.subr.bf16.mxu0 0
          %1033 = vmatpush1.bf16.msra.mxu0 0
          %1034 = vmatprep.subr.bf16.mxu0 0
          %1035 = vmatpush1.bf16.msra.mxu0 0
          %1036 = vmatprep.subr.bf16.mxu0 0
          %1037 = vmatpush1.bf16.msra.mxu0 0
          %1038 = vmatprep.subr.bf16.mxu0 0
          %1039 = vmatpush1.bf16.msra.mxu0 %v1022
          %1040 = vmatprep.subr.bf16.mxu0 0
          %1041 = vmatpush2.bf16.msra.mxu0 0
          %1042 = vmatprep.subr.bf16.mxu0 0
          %1043 = vmatpush2.bf16.msra.mxu0 0
          %1044 = vmatprep.subr.bf16.mxu0 0
          %1045 = vmatpush2.bf16.msra.mxu0 0
          %1046 = vmatprep.subr.bf16.mxu0 0
          %1047 = vmatpush2.bf16.msra.mxu0 0
          %1048 = vmatprep.subr.bf16.mxu0 0
          %1049 = vmatpush2.bf16.msra.mxu0 0
          %1050 = vmatprep.subr.bf16.mxu0 0
          %1051 = vmatpush2.bf16.msra.mxu0 0
          %1052 = vmatprep.subr.bf16.mxu0 0
          %1053 = vmatpush2.bf16.msra.mxu0 0
          %1054 = vmatprep.subr.bf16.mxu0 0
          %1055 = vmatpush2.bf16.msra.mxu0 0
          %1056 = vmatprep.mubr.bf16.mxu0 0
          %1057 = vmatmul.mubr.bf16.gmra.mxu0 %v1019
          %v1058 = vpop.f32.mrf.mxu0
          %v1059 = vadd.f32 0.0, %v1058
          %v1060 = vpop.f32.mrf.mxu0
          %v1061 = vpop.f32.mrf.mxu0
          %v1062 = vpop.f32.mrf.mxu0
          %1063 = vdwg.mxu0
          %v1064 = vadd.f32 %v867, %v921
          %v1065 = vadd.f32 %v868, %v967
          %v1066 = vadd.f32 %v869, %v1013
          %v1067 = vadd.f32 %v870, %v1059
          %1068 = vst.msk [vmem:[#allocation5] sm:$0xff] %vm327, %v1064
          %1069 = vst.msk [vmem:[#allocation5 + $0x8] sm:$0xff] %vm327, %v1065
          %1070 = vst.msk [vmem:[#allocation5 + $0x10] sm:$0xff] %vm327, %v1066
          %1071 = vst.msk [vmem:[#allocation5 + $0x18] sm:$0xff] %vm327, %v1067
          %1072 = vst.msk [vmem:[#allocation3] sm:$0xff] %vm838, %v766
          %1073 = vst.msk [vmem:[#allocation3 + $0x8] sm:$0xff] %vm838, %v767
          %1074 = vst.msk [vmem:[#allocation3 + $0x10] sm:$0xff] %vm838, %v768
          %1075 = vst.msk [vmem:[#allocation3 + $0x18] sm:$0xff] %vm838, %v769
        $region56: #{tpu_custom_call.1} parent=31 // pred_fallthru
          _
        // Predicated region
        $region57: #{tpu_custom_call.1} parent=31 // pred_check
          %p1076 = pneg %p302
        $region58: #{tpu_custom_call.1} parent=31 // pred_check_branch
          %1078 = sbr.rel (%p1076) target = $region60
        $region59: #{tpu_custom_call.1} parent=31 // pred_region
          %v1079 = vld [vmem:[#allocation4] sm:$0xff]
          %v1080 = vld [vmem:[#allocation4 + $0x8] sm:$0xff]
          %v1081 = vld [vmem:[#allocation4 + $0x10] sm:$0xff]
          %v1082 = vld [vmem:[#allocation4 + $0x18] sm:$0xff]
          %v1083 = vrcp.pop %v1079
          %v1084 = vrcp.pop %v1080
          %v1085 = vrcp.pop %v1081
          %v1086 = vrcp.pop %v1082
          %v1087 = vld [vmem:[#allocation5] sm:$0xff]
          %v1088 = vld [vmem:[#allocation5 + $0x8] sm:$0xff]
          %v1089 = vld [vmem:[#allocation5 + $0x10] sm:$0xff]
          %v1090 = vld [vmem:[#allocation5 + $0x18] sm:$0xff]
          %1092 = vset.pattern.permute.xlu0 0
          %1093 = vperm.xlu0 %1092, %v1083
          %v1094 = vpop.permute.xlu0 %1093
          %1097 = vset.pattern.permute.xlu0 0
          %1098 = vperm.xlu0 %1097, %v1084
          %v1099 = vpop.permute.xlu0 %1098
          %1102 = vset.pattern.permute.xlu0 0
          %1103 = vperm.xlu0 %1102, %v1085
          %v1104 = vpop.permute.xlu0 %1103
          %1107 = vset.pattern.permute.xlu0 0
          %1108 = vperm.xlu0 %1107, %v1086
          %v1109 = vpop.permute.xlu0 %1108
          %v1111 = vmul.f32 %v1087, %v1094
          %v1112 = vmul.f32 %v1088, %v1099
          %v1113 = vmul.f32 %v1089, %v1104
          %v1114 = vmul.f32 %v1090, %v1109
          %1115 = vst.msk [vmem:[%s295] sm:$0xff] %vm327, %v1111
          %1116 = vst.msk [vmem:[%s295 + $0x8] sm:$0xff] %vm327, %v1112
          %1117 = vst.msk [vmem:[%s295 + $0x10] sm:$0xff] %vm327, %v1113
          %1118 = vst.msk [vmem:[%s295 + $0x18] sm:$0xff] %vm327, %v1114
        $region60: #{tpu_custom_call.1} parent=31 // pred_fallthru
          _
        %s1119 = sand.u32 %s136, 1
        %s1120 = scalar_lea.sflag [#allocation8], %s1119
        %s1121 = sand.u32 %s136, 1
        %s1122 = smul.addr %s1121, 32
        %s1123 = scalar_lea.vmem [#allocation12], %s1122
        // Predicated region
        $region61: #{tpu_custom_call.1} parent=31 // pred_check
          %p1124 = pneg %p146
        $region62: #{tpu_custom_call.1} parent=31 // pred_check_branch
          %1126 = sbr.rel (%p1124) target = $region64
        $region63: #{tpu_custom_call.1} parent=31 // pred_region
          %s1127 = smul.u32 4, %s28
          %s1129 = ssub.s32 512, 512
          %1130 = vsyncadd %s1120, %s1129
          %s1131 = sadd.s32 %s29, %s1127
          %s1132 = smul.addr %s1131, 128
          %s1133 = scalar_lea.hbm %s3, %s1132
          %s1134 = sshll.u32 %s1123, 4
          %s1135 = int_to_ptr.vmem [resolvable:$true] %s1134
          %1140 = dma.vmem_to_hbm [thread:$0]  %s1135, 512, %s1133, %s1120, 128, 128, 8
        $region64: #{tpu_custom_call.1} parent=31 // pred_fallthru
          _
      $region32: #{tpu_custom_call.1} parent=5 // pred_fallthru
        _
      %p1141 = scmp.le.s32.totalorder 2, %s18
      // Predicated region
      $region65: #{tpu_custom_call.1} parent=5 // pred_check
        %p1142 = pneg %p1141
      $region66: #{tpu_custom_call.1} parent=5 // pred_check_branch
        %1144 = sbr.rel (%p1142) target = $region68
      $region67: #{tpu_custom_call.1} parent=5 // pred_region
        %s1145 = ssub.s32 %s18, 2
        // Predicated region
        $region69: #{tpu_custom_call.1} parent=67 // pred_check
          %p1146 = pneg %p152
        $region70: #{tpu_custom_call.1} parent=67 // pred_check_branch
          %1148 = sbr.rel (%p1146) target = $region72
        $region71: #{tpu_custom_call.1} parent=67 // pred_region
          %s1149 = sand.u32 %s137, 1
          %s1150 = scalar_lea.sflag [#allocation8], %s1149
          %s1151 = sand.u32 %s137, 1
          %s1152 = smul.addr %s1151, 32
          %s1153 = scalar_lea.vmem [#allocation12], %s1152
          %1154 = dma.done %s1150, 512
        $region72: #{tpu_custom_call.1} parent=67 // pred_fallthru
          _
      $region68: #{tpu_custom_call.1} parent=5 // pred_fallthru
        _
    $region6: #{tpu_custom_call.1} parent=1 // loop_footer
      %s22 = sadd.s32 1, %s18
    $region7: #{tpu_custom_call.1} parent=1 // loop_footer_branch
      %17 = sbr.rel target = $region3
    $region8: #{tpu_custom_call.1} parent=1 // loop_exit
      _
    %1155 = vsyncpa [#allocation7], 1
    %s1156 = scalar_lea.sflag [#allocation7], 1
    %1157 = vsyncpa %s1156, 1
    %1158 = vsyncpa [#allocation10], 1
    %s1159 = scalar_lea.sflag [#allocation10], 1
    %1160 = vsyncpa %s1159, 1
    %1161 = vsyncpa [#allocation8], 1
    %s1162 = scalar_lea.sflag [#allocation8], 1
    %1163 = vsyncpa %s1162, 1

</llo_original>
